<compile_context>
chip_gen: v7x
topology: tpu7x:2x2x1
jax: 0.10.0
libtpu: 0.0.40
codegen_flags: <defaults>
</compile_context>

<pallas_src>
import functools

import jax
import jax.numpy as jnp
from jax.experimental import pallas as pl
from jax.experimental.pallas import tpu as pltpu

_TARGET_LANES = 128  # full vreg lane width


def _fold_factor(d):
    """How many batch rows to stack per lane row so the lane width hits 128."""
    two_d = 2 * d
    if two_d >= _TARGET_LANES or _TARGET_LANES % two_d != 0:
        return 1
    return _TARGET_LANES // two_d


def _residual_block_kernel(x_ref, w1_ref, w2_ref, w3_ref, o_ref):
    """x_ref: (TB, L) f32 packed [real | imag] (x f rows); w*_ref: (L, L)."""
    x = x_ref[...]                                   # f32, kept for residual
    mm_dtype = w1_ref.dtype

    # Layer 1 + ComplexReLU (relu acts independently on real & imag -> on the
    # packed plane it is just an elementwise relu).
    h = jnp.dot(x.astype(mm_dtype), w1_ref[...],
                preferred_element_type=jnp.float32)
    h = jnp.maximum(h, 0.0)
    # Layer 2 + ComplexReLU
    h = jnp.dot(h.astype(mm_dtype), w2_ref[...],
                preferred_element_type=jnp.float32)
    h = jnp.maximum(h, 0.0)
    # Layer 3 (no activation)
    h = jnp.dot(h.astype(mm_dtype), w3_ref[...],
                preferred_element_type=jnp.float32)

    # Residual add in f32.
    o_ref[...] = x + h


def pack_complex_weights(weights, dtype=jnp.float32):
    """Build block weights ONCE at module-init time (not per forward).

    weights: list of 3 (Wr, Wi) pairs, each (d, d) in nn.Linear (out, in)
    convention.  Returns 3 arrays of shape (f*2d, f*2d) where f = fold factor
    (f*2d == 128 for small d), such that a lane-folded packed activation row
    times the block weight yields the lane-folded packed output row.
    """
    d = weights[0][0].shape[0]
    f = _fold_factor(d)
    eye = jnp.eye(f, dtype=dtype)
    packed = []
    for wr, wi in weights:
        wrt = wr.T.astype(dtype)                     # (in, out)
        wit = wi.T.astype(dtype)
        top = jnp.concatenate([wrt, wit], axis=1)    # (d, 2d)
        bot = jnp.concatenate([-wit, wrt], axis=1)   # (d, 2d)
        w_blk = jnp.concatenate([top, bot], axis=0)  # (2d, 2d)
        if f > 1:
            w_blk = jnp.kron(eye, w_blk)             # (f*2d, f*2d) block-diag
        packed.append(w_blk)
    return packed


@functools.partial(jax.jit, static_argnames=("block_b",))
def residual_block(xr, xi, packed_weights, *, block_b=1024):
    """xr, xi: (B, d) float32.  packed_weights: output of pack_complex_weights.

    Returns (out_real, out_imag), each (B, d) float32.
    """
    B, d = xr.shape
    two_d = 2 * d
    f = _fold_factor(d)
    lanes = f * two_d
    assert packed_weights[0].shape == (lanes, lanes), "re-run pack_complex_weights"

    # Lane-dense packed activations: [real | imag] on the last (lane) axis.
    x = jnp.concatenate([xr.astype(jnp.float32), xi.astype(jnp.float32)],
                        axis=1)                      # (B, 2d)

    # Fold f batch rows per 128-lane row (pure contiguous reshape, no copy).
    b_f = pl.cdiv(B, f) * f
    if b_f != B:
        x = jnp.pad(x, ((0, b_f - B), (0, 0)))
    rows = b_f // f
    x = x.reshape(rows, lanes)

    # Batch tile: multiple of 8 sublanes, capped at block_b (large tiles
    # amortize per-grid-step overhead); pad rows to a whole number of tiles.
    tb = max(8, (min(block_b, rows) // 8) * 8)
    n_blocks = pl.cdiv(rows, tb)
    rows_padded = n_blocks * tb
    if rows_padded != rows:
        x = jnp.pad(x, ((0, rows_padded - rows), (0, 0)))

    x_spec = pl.BlockSpec((tb, lanes), lambda i: (i, 0))
    w_spec = pl.BlockSpec((lanes, lanes), lambda i: (0, 0))  # VMEM-resident

    out = pl.pallas_call(
        _residual_block_kernel,
        out_shape=jax.ShapeDtypeStruct((rows_padded, lanes), jnp.float32),
        grid_spec=pltpu.PrefetchScalarGridSpec(
            num_scalar_prefetch=0,
            grid=(n_blocks,),
            in_specs=[x_spec, w_spec, w_spec, w_spec],
            out_specs=x_spec,
        ),
        compiler_params=pltpu.CompilerParams(
            dimension_semantics=("parallel",)),
    )(x, *packed_weights)

    # Unfold lanes back to (B, 2d), then split real / imag.
    out = out[:rows].reshape(b_f, two_d)[:B]
    return out[:, :d], out[:, d:]


def _reference(xr, xi, weights):
    """Pure-JAX complex reference mirroring the PyTorch module."""
    x = xr + 1j * xi

    def clin(z, wr, wi):
        zr, zi = z.real, z.imag
        return (zr @ wr.T - zi @ wi.T) + 1j * (zi @ wr.T + zr @ wi.T)

    def crelu(z):
        return jnp.maximum(z.real, 0.0) + 1j * jnp.maximum(z.imag, 0.0)

    h = clin(x, *weights[0])
    h = crelu(h)
    h = clin(h, *weights[1])
    h = crelu(h)
    h = clin(h, *weights[2])
    return x + h


if __name__ == "__main__":
    # Small shapes consistent with the module: B not a multiple of the batch
    # tile or fold factor (exercises padding) and block_b=8 (multi-step grid).
    B, d = 20, 32

    key = jax.random.PRNGKey(0)
    kxr, kxi, *wkeys = jax.random.split(key, 2 + 6)

    xr = jax.random.normal(kxr, (B, d), dtype=jnp.float32)
    xi = jax.random.normal(kxi, (B, d), dtype=jnp.float32)

    # Deterministic weight init (nn.Linear-like uniform scale).
    bound = 1.0 / (d ** 0.5)
    weights = []
    for li in range(3):
        wr = jax.random.uniform(wkeys[2 * li], (d, d),
                                minval=-bound, maxval=bound, dtype=jnp.float32)
        wi = jax.random.uniform(wkeys[2 * li + 1], (d, d),
                                minval=-bound, maxval=bound, dtype=jnp.float32)
        weights.append((wr, wi))

    # Weight packing happens ONCE here (module init), not inside residual_block.
    packed_w = pack_complex_weights(weights, dtype=jnp.float32)

    out_r, out_i = residual_block(xr, xi, packed_w, block_b=8)
    jax.block_until_ready((out_r, out_i))

    ref = _reference(xr, xi, weights)
    assert jnp.allclose(out_r, ref.real, atol=1e-4, rtol=1e-4)
    assert jnp.allclose(out_i, ref.imag, atol=1e-4, rtol=1e-4)

    print("KERNEL_OK")
</pallas_src>

<mosaic_0001>
module attributes {stable_mosaic.version = 11 : i64} {
  func.func @_residual_block_kernel(%arg0: i32, %arg1: memref<8x128xf32, #tpu.memory_space<vmem>>, %arg2: memref<128x128xf32, #tpu.memory_space<vmem>>, %arg3: memref<128x128xf32, #tpu.memory_space<vmem>>, %arg4: memref<128x128xf32, #tpu.memory_space<vmem>>, %arg5: memref<8x128xf32, #tpu.memory_space<vmem>>) attributes {dimension_semantics = [#tpu.dimension_semantics<parallel>], iteration_bounds = array<i64: 2>, scalar_prefetch = 0 : i64, scratch_operands = 0 : i64, tpu.core_type = #tpu.core_type<tc>, window_params = [{transform_indices = @transform_0, window_bounds = array<i64: 8, 128>}, {pipeline_mode = #tpu.pipeline_mode<synchronous>, transform_indices = @transform_1, window_bounds = array<i64: 128, 128>}, {pipeline_mode = #tpu.pipeline_mode<synchronous>, transform_indices = @transform_2, window_bounds = array<i64: 128, 128>}, {pipeline_mode = #tpu.pipeline_mode<synchronous>, transform_indices = @transform_3, window_bounds = array<i64: 128, 128>}, {transform_indices = @transform_4, window_bounds = array<i64: 8, 128>}]} {
    %c0 = arith.constant 0 : index
    %c0_0 = arith.constant 0 : index
    %0 = vector.load %arg1[%c0, %c0_0] : memref<8x128xf32, #tpu.memory_space<vmem>>, vector<8x128xf32>
    %c0_1 = arith.constant 0 : index
    %c0_2 = arith.constant 0 : index
    %1 = vector.load %arg2[%c0_1, %c0_2] : memref<128x128xf32, #tpu.memory_space<vmem>>, vector<128x128xf32>
    %cst = arith.constant dense<0.000000e+00> : vector<8x128xf32>
    %2 = tpu.matmul %0, %1, %cst {dimension_numbers = #tpu.dot_dimension_numbers<[1], [0], [0], [1], [0, 0, 1, 1], [], []>} : vector<8x128xf32>, vector<128x128xf32>, vector<8x128xf32> -> vector<8x128xf32>
    %cst_3 = arith.constant 0.000000e+00 : f32
    %3 = vector.broadcast %cst_3 : f32 to vector<8x128xf32>
    %4 = arith.maximumf %2, %3 : vector<8x128xf32>
    %c0_4 = arith.constant 0 : index
    %c0_5 = arith.constant 0 : index
    %5 = vector.load %arg3[%c0_4, %c0_5] : memref<128x128xf32, #tpu.memory_space<vmem>>, vector<128x128xf32>
    %cst_6 = arith.constant dense<0.000000e+00> : vector<8x128xf32>
    %6 = tpu.matmul %4, %5, %cst_6 {dimension_numbers = #tpu.dot_dimension_numbers<[1], [0], [0], [1], [0, 0, 1, 1], [], []>} : vector<8x128xf32>, vector<128x128xf32>, vector<8x128xf32> -> vector<8x128xf32>
    %cst_7 = arith.constant 0.000000e+00 : f32
    %7 = vector.broadcast %cst_7 : f32 to vector<8x128xf32>
    %8 = arith.maximumf %6, %7 : vector<8x128xf32>
    %c0_8 = arith.constant 0 : index
    %c0_9 = arith.constant 0 : index
    %9 = vector.load %arg4[%c0_8, %c0_9] : memref<128x128xf32, #tpu.memory_space<vmem>>, vector<128x128xf32>
    %cst_10 = arith.constant dense<0.000000e+00> : vector<8x128xf32>
    %10 = tpu.matmul %8, %9, %cst_10 {dimension_numbers = #tpu.dot_dimension_numbers<[1], [0], [0], [1], [0, 0, 1, 1], [], []>} : vector<8x128xf32>, vector<128x128xf32>, vector<8x128xf32> -> vector<8x128xf32>
    %11 = arith.addf %0, %10 : vector<8x128xf32>
    %c0_11 = arith.constant 0 : index
    %c0_12 = arith.constant 0 : index
    %12 = vector.load %arg5[%c0_11, %c0_12] : memref<8x128xf32, #tpu.memory_space<vmem>>, vector<8x128xf32>
    tpu.vector_store %arg5[%c0_11, %c0_12], %11 {strides = array<i32>} : memref<8x128xf32, #tpu.memory_space<vmem>>, vector<8x128xf32>,
    return
  }
  func.func @transform_0(%arg0: i32) -> (i32, i32) {
    %c0_i32 = arith.constant 0 : i32
    %c0_i32_0 = arith.constant 0 : i32
    return %arg0, %c0_i32 : i32, i32
  }
  func.func @transform_1(%arg0: i32) -> (i32, i32) {
    %c0_i32 = arith.constant 0 : i32
    %c0_i32_0 = arith.constant 0 : i32
    %c0_i32_1 = arith.constant 0 : i32
    return %c0_i32, %c0_i32_0 : i32, i32
  }
  func.func @transform_2(%arg0: i32) -> (i32, i32) {
    %c0_i32 = arith.constant 0 : i32
    %c0_i32_0 = arith.constant 0 : i32
    %c0_i32_1 = arith.constant 0 : i32
    return %c0_i32, %c0_i32_0 : i32, i32
  }
  func.func @transform_3(%arg0: i32) -> (i32, i32) {
    %c0_i32 = arith.constant 0 : i32
    %c0_i32_0 = arith.constant 0 : i32
    %c0_i32_1 = arith.constant 0 : i32
    return %c0_i32, %c0_i32_0 : i32, i32
  }
  func.func @transform_4(%arg0: i32) -> (i32, i32) {
    %c0_i32 = arith.constant 0 : i32
    %c0_i32_0 = arith.constant 0 : i32
    return %arg0, %c0_i32 : i32, i32
  }
}

</mosaic_0001>

<llo_original>
// kernel: residual_block.1
$region0: #{residual_block.1}
  #allocation0 [shape = 'u32[]', space=smem, size = 0x4, offset = 0x4, fixed_abs, tag = 'smem constant byte address 0x4 - core index']
  #allocation1 [shape = 'u32[144,128]{1,0:T(1,128)}', space=vmem, size = 0x12000, scoped, tag = 'internal scratch']
  %s0 = inlined_call_operand.vmem [shape: f32[16,128], index: 0, kind: input, shape index: {}]
  %s1 = inlined_call_operand.vmem [shape: f32[128,128], index: 1, kind: input, shape index: {}]
  %s2 = inlined_call_operand.hbm [shape: f32[128,128], index: 2, kind: input, shape index: {}]
  %s3 = inlined_call_operand.hbm [shape: f32[128,128], index: 3, kind: input, shape index: {}]
  %s4 = inlined_call_operand.vmem [shape: f32[16,128], index: 4, kind: output, shape index: {}]
  %s5 = sld [smem:[#allocation0]]
  $region57: #{residual_block.1} parent=0
    _
  %s7 = ssub.s32 1, %s5
  %s8 = scalar_select 0, %s7, %s5
  $region1: #{residual_block.1} parent=0
    #allocation2 [shape = 'u8[65536]{0}', space=vmem, size = 0x10000, scoped, tag = 'input window, operand 2, single buffered']
    #allocation3 [shape = 's32[2]{0}', space=sflag, size = 0x8, scoped, tag = 'scoped memory for residual_block.1']
    #allocation4 [shape = 'u8[65536]{0}', space=vmem, size = 0x10000, scoped, tag = 'input window, operand 3, single buffered']
    #allocation5 [shape = 's32[1]{0}', space=sflag, size = 0x4, scoped, tag = 'scoped memory for residual_block.1']
    %9 = vsyncpa [#allocation3], 0
    %10 = vsyncpa [#allocation5], 0
    loop: start=0, step=1, limit=4
    $region2: #{residual_block.1} parent=1 // loop_pre_header
      _
    $region3: #{residual_block.1} parent=1 // loop_header
      %s12 = sphi 0, %s16
      %p13 = scmp.ge.s32.totalorder %s12, 4
      %s22 = sphi 0, %s24
      %s25 = sphi 0, %s22
      %s26 = sphi 0, %s25
      %s42 = sphi 0, %s26
      %s46 = sphi 0, %s46
      %s48 = sphi 0, %s46
      %s49 = sphi 0, %s48
      %s63 = sphi 0, %s49
      %s67 = sphi 0, %s67
      %s69 = sphi 0, %s67
      %s70 = sphi 0, %s69
      %s84 = sphi 0, %s70
      %s88 = sphi 0, %s88
      %s90 = sphi 0, %s88
      %s91 = sphi 0, %s90
      %s105 = sphi 0, %s91
      %s111 = sphi 0, %s113
      %s114 = sphi 0, %s111
      %s115 = sphi 0, %s114
      %s131 = sphi 0, %s115
    $region4: #{residual_block.1} parent=1 // loop_header_branch
      %15 = sbr.rel (%p13) target = $region8
    $region5: #{residual_block.1} parent=1 // loop_body
      %s17 = ssub.s32 %s12, 1
      %s18 = ssub.s32 %s12, 2
      %s19 = sadd.s32 %s12, 1
      %s20 = ssub.s32 %s12, %s19
      %p21 = scmp.eq.s32.totalorder %s20, 0
      %s23 = sadd.s32 %s22, 1
      %s24 = scalar_select %p21, %s22, %s23
      %p27 = pneg %p21
      %p28 = scmp.eq.s32.totalorder %s12, 1
      %p29 = por %p27, %p28
      %p30 = scmp.ne.s32.totalorder %s22, %s25
      %p31 = scmp.eq.s32.totalorder %s12, 0
      %p32 = por %p30, %p31
      %p33 = scmp.ne.s32.totalorder %s22, %s25
      %p34 = scmp.eq.s32.totalorder %s17, 1
      %p35 = por %p33, %p34
      %p36 = scmp.ne.s32.totalorder %s25, %s26
      %p37 = scmp.eq.s32.totalorder %s17, 0
      %p38 = por %p36, %p37
      %p39 = scmp.ne.s32.totalorder %s25, %s26
      %p40 = scmp.eq.s32.totalorder %s18, 1
      %p41 = por %p39, %p40
      %p43 = scmp.ne.s32.totalorder %s26, %s42
      %p44 = scmp.eq.s32.totalorder %s18, 0
      %p45 = por %p43, %p44
      %s47 = sadd.s32 %s46, 1
      %p50 = scmp.eq.s32.totalorder %s12, 1
      %p51 = scmp.ne.s32.totalorder %s46, %s48
      %p52 = scmp.eq.s32.totalorder %s12, 0
      %p53 = por %p51, %p52
      %p54 = scmp.ne.s32.totalorder %s46, %s48
      %p55 = scmp.eq.s32.totalorder %s17, 1
      %p56 = por %p54, %p55
      %p57 = scmp.ne.s32.totalorder %s48, %s49
      %p58 = scmp.eq.s32.totalorder %s17, 0
      %p59 = por %p57, %p58
      %p60 = scmp.ne.s32.totalorder %s48, %s49
      %p61 = scmp.eq.s32.totalorder %s18, 1
      %p62 = por %p60, %p61
      %p64 = scmp.ne.s32.totalorder %s49, %s63
      %p65 = scmp.eq.s32.totalorder %s18, 0
      %p66 = por %p64, %p65
      %s68 = sadd.s32 %s67, 1
      %p71 = scmp.eq.s32.totalorder %s12, 1
      %p72 = scmp.ne.s32.totalorder %s67, %s69
      %p73 = scmp.eq.s32.totalorder %s12, 0
      %p74 = por %p72, %p73
      %p75 = scmp.ne.s32.totalorder %s67, %s69
      %p76 = scmp.eq.s32.totalorder %s17, 1
      %p77 = por %p75, %p76
      %p78 = scmp.ne.s32.totalorder %s69, %s70
      %p79 = scmp.eq.s32.totalorder %s17, 0
      %p80 = por %p78, %p79
      %p81 = scmp.ne.s32.totalorder %s69, %s70
      %p82 = scmp.eq.s32.totalorder %s18, 1
      %p83 = por %p81, %p82
      %p85 = scmp.ne.s32.totalorder %s70, %s84
      %p86 = scmp.eq.s32.totalorder %s18, 0
      %p87 = por %p85, %p86
      %s89 = sadd.s32 %s88, 1
      %p92 = scmp.eq.s32.totalorder %s12, 1
      %p93 = scmp.ne.s32.totalorder %s88, %s90
      %p94 = scmp.eq.s32.totalorder %s12, 0
      %p95 = por %p93, %p94
      %p96 = scmp.ne.s32.totalorder %s88, %s90
      %p97 = scmp.eq.s32.totalorder %s17, 1
      %p98 = por %p96, %p97
      %p99 = scmp.ne.s32.totalorder %s90, %s91
      %p100 = scmp.eq.s32.totalorder %s17, 0
      %p101 = por %p99, %p100
      %p102 = scmp.ne.s32.totalorder %s90, %s91
      %p103 = scmp.eq.s32.totalorder %s18, 1
      %p104 = por %p102, %p103
      %p106 = scmp.ne.s32.totalorder %s91, %s105
      %p107 = scmp.eq.s32.totalorder %s18, 0
      %p108 = por %p106, %p107
      %s109 = ssub.s32 %s12, %s19
      %p110 = scmp.eq.s32.totalorder %s109, 0
      %s112 = sadd.s32 %s111, 1
      %s113 = scalar_select %p110, %s111, %s112
      %p116 = pneg %p110
      %p117 = scmp.eq.s32.totalorder %s12, 1
      %p118 = por %p116, %p117
      %p119 = scmp.ne.s32.totalorder %s111, %s114
      %p120 = scmp.eq.s32.totalorder %s12, 0
      %p121 = por %p119, %p120
      %p122 = scmp.ne.s32.totalorder %s111, %s114
      %p123 = scmp.eq.s32.totalorder %s17, 1
      %p124 = por %p122, %p123
      %p125 = scmp.ne.s32.totalorder %s114, %s115
      %p126 = scmp.eq.s32.totalorder %s17, 0
      %p127 = por %p125, %p126
      %p128 = scmp.ne.s32.totalorder %s114, %s115
      %p129 = scmp.eq.s32.totalorder %s18, 1
      %p130 = por %p128, %p129
      %p132 = scmp.ne.s32.totalorder %s115, %s131
      %p133 = scmp.eq.s32.totalorder %s18, 0
      %p134 = por %p132, %p133
      %p135 = scmp.le.s32.totalorder 1, %s12
      %p136 = scmp.lt.s32.totalorder %s12, 3
      %p137 = pnand %p135, %p136
      %p138 = pneg %p137
      // Predicated region
      $region9: #{residual_block.1} parent=5 // pred_check
        _
      $region10: #{residual_block.1} parent=5 // pred_check_branch
        %140 = sbr.rel (%p137) target = $region12
      $region11: #{residual_block.1} parent=5 // pred_region
        %s141 = ssub.s32 %s12, 1
        // Predicated region
        $region13: #{residual_block.1} parent=11 // pred_check
          %p142 = pneg %p59
        $region14: #{residual_block.1} parent=11 // pred_check_branch
          %144 = sbr.rel (%p142) target = $region16
        $region15: #{residual_block.1} parent=11 // pred_region
          _
        $region16: #{residual_block.1} parent=11 // pred_fallthru
          _
        // Predicated region
        $region17: #{residual_block.1} parent=11 // pred_check
          %p145 = pneg %p80
        $region18: #{residual_block.1} parent=11 // pred_check_branch
          %147 = sbr.rel (%p145) target = $region20
        $region19: #{residual_block.1} parent=11 // pred_region
          %s149 = ssub.s32 2048, 2048
          %150 = vsyncadd [#allocation3], %s149
          %s151 = sshll.u32 [#allocation2], 4
          %s152 = int_to_ptr.vmem [resolvable:$true] %s151
          %157 = dma.hbm_to_vmem [thread:$0]  %s2, 2048, %s152, [#allocation3], 128, 128, 8
        $region20: #{residual_block.1} parent=11 // pred_fallthru
          _
        // Predicated region
        $region21: #{residual_block.1} parent=11 // pred_check
          %p158 = pneg %p101
        $region22: #{residual_block.1} parent=11 // pred_check_branch
          %160 = sbr.rel (%p158) target = $region24
        $region23: #{residual_block.1} parent=11 // pred_region
          %s162 = ssub.s32 2048, 2048
          %163 = vsyncadd [#allocation5], %s162
          %s164 = sshll.u32 [#allocation4], 4
          %s165 = int_to_ptr.vmem [resolvable:$true] %s164
          %170 = dma.hbm_to_vmem [thread:$0]  %s3, 2048, %s165, [#allocation5], 128, 128, 8
        $region24: #{residual_block.1} parent=11 // pred_fallthru
          _
      $region12: #{residual_block.1} parent=5 // pred_fallthru
        _
      %p171 = scmp.lt.s32.totalorder %s12, 2
      // Predicated region
      $region25: #{residual_block.1} parent=5 // pred_check
        %p172 = pneg %p171
      $region26: #{residual_block.1} parent=5 // pred_check_branch
        %174 = sbr.rel (%p172) target = $region28
      $region27: #{residual_block.1} parent=5 // pred_region
        // Predicated region
        $region29: #{residual_block.1} parent=27 // pred_check
          %p175 = pneg %p32
        $region30: #{residual_block.1} parent=27 // pred_check_branch
          %177 = sbr.rel (%p175) target = $region32
        $region31: #{residual_block.1} parent=27 // pred_region
          %p178 = scmp.lt.s32.totalorder %s12, 1
          %s179 = scalar_select %p178, %s12, 1
          %s180 = smul.addr %s179, 8
          %s181 = scalar_lea.vmem %s0, %s180
        $region32: #{residual_block.1} parent=27 // pred_fallthru
          _
      $region28: #{residual_block.1} parent=5 // pred_fallthru
        _
      %p182 = scmp.le.s32.totalorder 1, %s12
      %p183 = scmp.lt.s32.totalorder %s12, 3
      %p184 = pnand %p182, %p183
      %p185 = pneg %p184
      // Predicated region
      $region33: #{residual_block.1} parent=5 // pred_check
        _
      $region34: #{residual_block.1} parent=5 // pred_check_branch
        %187 = sbr.rel (%p184) target = $region36
      $region35: #{residual_block.1} parent=5 // pred_region
        %s188 = ssub.s32 %s12, 1
        // Predicated region
        $region37: #{residual_block.1} parent=35 // pred_check
          %p189 = pneg %p80
        $region38: #{residual_block.1} parent=35 // pred_check_branch
          %191 = sbr.rel (%p189) target = $region40
        $region39: #{residual_block.1} parent=35 // pred_region
          %192 = dma.done [#allocation3], 2048
        $region40: #{residual_block.1} parent=35 // pred_fallthru
          _
        // Predicated region
        $region41: #{residual_block.1} parent=35 // pred_check
          %p193 = pneg %p101
        $region42: #{residual_block.1} parent=35 // pred_check_branch
          %195 = sbr.rel (%p193) target = $region44
        $region43: #{residual_block.1} parent=35 // pred_region
          %196 = dma.done [#allocation5], 2048
        $region44: #{residual_block.1} parent=35 // pred_fallthru
          _
        %p197 = scmp.lt.s32.totalorder %s17, 1
        %s198 = scalar_select %p197, %s17, 1
        %s199 = smul.addr %s198, 8
        %s200 = scalar_lea.vmem %s0, %s199
        %p201 = pneg %p38
        %p202 = pneg %p35
        %p203 = pneg %p59
        %p204 = pneg %p56
        %p205 = pneg %p80
        %p206 = pneg %p77
        %p207 = pneg %p101
        %p208 = pneg %p98
        %p209 = pneg %p127
        %p210 = pneg %p124
        %p211 = scmp.lt.s32.totalorder %s17, 1
        %s212 = scalar_select %p211, %s17, 1
        %s213 = smul.addr %s212, 8
        %s214 = scalar_lea.vmem %s4, %s213
        %p215 = scmp.lt.s32.totalorder %s17, 1
        %s216 = scalar_select %p215, %s17, 1
        %s217 = smul.addr %s216, 8
        %s218 = scalar_lea.vmem %s0, %s217
        %p219 = scmp.lt.s32.totalorder %s17, 1
        %s220 = scalar_select %p219, %s17, 1
        %s221 = smul.addr %s220, 8
        %s222 = scalar_lea.vmem %s4, %s221
        %v223 = vld [vmem:[%s218] sm:$0xff]
        %v224 = vld [vmem:[%s1] sm:$0xff]
        %v225 = vld [vmem:[%s1 + $0x8] sm:$0xff]
        %v226 = vld [vmem:[%s1 + $0x10] sm:$0xff]
        %v227 = vld [vmem:[%s1 + $0x18] sm:$0xff]
        %v228 = vld [vmem:[%s1 + $0x20] sm:$0xff]
        %v229 = vld [vmem:[%s1 + $0x28] sm:$0xff]
        %v230 = vld [vmem:[%s1 + $0x30] sm:$0xff]
        %v231 = vld [vmem:[%s1 + $0x38] sm:$0xff]
        %v232 = vld [vmem:[%s1 + $0x40] sm:$0xff]
        %v233 = vld [vmem:[%s1 + $0x48] sm:$0xff]
        %v234 = vld [vmem:[%s1 + $0x50] sm:$0xff]
        %v235 = vld [vmem:[%s1 + $0x58] sm:$0xff]
        %v236 = vld [vmem:[%s1 + $0x60] sm:$0xff]
        %v237 = vld [vmem:[%s1 + $0x68] sm:$0xff]
        %v238 = vld [vmem:[%s1 + $0x70] sm:$0xff]
        %v239 = vld [vmem:[%s1 + $0x78] sm:$0xff]
        %240 = vmatprep.subr.mxu0 0.0
        %241 = vmatpush1.msra.mxu0 %v224
        %242 = vmatprep.subr.mxu0 0.0
        %243 = vmatpush1.msra.mxu0 %v225
        %244 = vmatprep.subr.mxu0 0.0
        %245 = vmatpush1.msra.mxu0 %v226
        %246 = vmatprep.subr.mxu0 0.0
        %247 = vmatpush1.msra.mxu0 %v227
        %248 = vmatprep.subr.mxu0 0.0
        %249 = vmatpush1.msra.mxu0 %v228
        %250 = vmatprep.subr.mxu0 0.0
        %251 = vmatpush1.msra.mxu0 %v229
        %252 = vmatprep.subr.mxu0 0.0
        %253 = vmatpush1.msra.mxu0 %v230
        %254 = vmatprep.subr.mxu0 0.0
        %255 = vmatpush1.msra.mxu0 %v231
        %256 = vmatprep.subr.mxu0 0.0
        %257 = vmatpush1.msra.mxu0 %v232
        %258 = vmatprep.subr.mxu0 0.0
        %259 = vmatpush1.msra.mxu0 %v233
        %260 = vmatprep.subr.mxu0 0.0
        %261 = vmatpush1.msra.mxu0 %v234
        %262 = vmatprep.subr.mxu0 0.0
        %263 = vmatpush1.msra.mxu0 %v235
        %264 = vmatprep.subr.mxu0 0.0
        %265 = vmatpush1.msra.mxu0 %v236
        %266 = vmatprep.subr.mxu0 0.0
        %267 = vmatpush1.msra.mxu0 %v237
        %268 = vmatprep.subr.mxu0 0.0
        %269 = vmatpush1.msra.mxu0 %v238
        %270 = vmatprep.subr.mxu0 0.0
        %271 = vmatpush1.msra.mxu0 %v239
        %272 = vmatprep.subr.mxu0 0.0
        %273 = vmatpush1.msra.mxu0 0.0
        %274 = vmatprep.subr.mxu0 0.0
        %275 = vmatpush1.msra.mxu0 0.0
        %276 = vmatprep.subr.mxu0 0.0
        %277 = vmatpush1.msra.mxu0 0.0
        %278 = vmatprep.subr.mxu0 0.0
        %279 = vmatpush1.msra.mxu0 0.0
        %280 = vmatprep.subr.mxu0 0.0
        %281 = vmatpush1.msra.mxu0 0.0
        %282 = vmatprep.subr.mxu0 0.0
        %283 = vmatpush1.msra.mxu0 0.0
        %284 = vmatprep.subr.mxu0 0.0
        %285 = vmatpush1.msra.mxu0 0.0
        %286 = vmatprep.subr.mxu0 0.0
        %287 = vmatpush1.msra.mxu0 0.0
        %288 = vmatprep.subr.mxu0 0.0
        %289 = vmatpush1.msra.mxu0 0.0
        %290 = vmatprep.subr.mxu0 0.0
        %291 = vmatpush1.msra.mxu0 0.0
        %292 = vmatprep.subr.mxu0 0.0
        %293 = vmatpush1.msra.mxu0 0.0
        %294 = vmatprep.subr.mxu0 0.0
        %295 = vmatpush1.msra.mxu0 0.0
        %296 = vmatprep.subr.mxu0 0.0
        %297 = vmatpush1.msra.mxu0 0.0
        %298 = vmatprep.subr.mxu0 0.0
        %299 = vmatpush1.msra.mxu0 0.0
        %300 = vmatprep.subr.mxu0 0.0
        %301 = vmatpush1.msra.mxu0 0.0
        %302 = vmatprep.subr.mxu0 0.0
        %303 = vmatpush1.msra.mxu0 0.0
        %304 = vmatprep.mubr.f32.mxu0 0.0
        %305 = vmatmul.mubr.f32.gmra.mrb[0].mxu0 %v223
        %v306 = vpop.f32.mrb[0].mxu0
        %v307 = vadd.f32 0.0, %v306
        %v308 = vpop.f32.mrb[0].mxu0
        %309 = vdwg.mxu0
        %v310 = vmax.f32 %v307, 0.0
        %v311 = vld [vmem:[#allocation2] sm:$0xff]
        %v312 = vld [vmem:[#allocation2 + $0x8] sm:$0xff]
        %v313 = vld [vmem:[#allocation2 + $0x10] sm:$0xff]
        %v314 = vld [vmem:[#allocation2 + $0x18] sm:$0xff]
        %v315 = vld [vmem:[#allocation2 + $0x20] sm:$0xff]
        %v316 = vld [vmem:[#allocation2 + $0x28] sm:$0xff]
        %v317 = vld [vmem:[#allocation2 + $0x30] sm:$0xff]
        %v318 = vld [vmem:[#allocation2 + $0x38] sm:$0xff]
        %v319 = vld [vmem:[#allocation2 + $0x40] sm:$0xff]
        %v320 = vld [vmem:[#allocation2 + $0x48] sm:$0xff]
        %v321 = vld [vmem:[#allocation2 + $0x50] sm:$0xff]
        %v322 = vld [vmem:[#allocation2 + $0x58] sm:$0xff]
        %v323 = vld [vmem:[#allocation2 + $0x60] sm:$0xff]
        %v324 = vld [vmem:[#allocation2 + $0x68] sm:$0xff]
        %v325 = vld [vmem:[#allocation2 + $0x70] sm:$0xff]
        %v326 = vld [vmem:[#allocation2 + $0x78] sm:$0xff]
        %327 = vmatprep.subr.mxu0 0.0
        %328 = vmatpush1.msra.mxu0 %v311
        %329 = vmatprep.subr.mxu0 0.0
        %330 = vmatpush1.msra.mxu0 %v312
        %331 = vmatprep.subr.mxu0 0.0
        %332 = vmatpush1.msra.mxu0 %v313
        %333 = vmatprep.subr.mxu0 0.0
        %334 = vmatpush1.msra.mxu0 %v314
        %335 = vmatprep.subr.mxu0 0.0
        %336 = vmatpush1.msra.mxu0 %v315
        %337 = vmatprep.subr.mxu0 0.0
        %338 = vmatpush1.msra.mxu0 %v316
        %339 = vmatprep.subr.mxu0 0.0
        %340 = vmatpush1.msra.mxu0 %v317
        %341 = vmatprep.subr.mxu0 0.0
        %342 = vmatpush1.msra.mxu0 %v318
        %343 = vmatprep.subr.mxu0 0.0
        %344 = vmatpush1.msra.mxu0 %v319
        %345 = vmatprep.subr.mxu0 0.0
        %346 = vmatpush1.msra.mxu0 %v320
        %347 = vmatprep.subr.mxu0 0.0
        %348 = vmatpush1.msra.mxu0 %v321
        %349 = vmatprep.subr.mxu0 0.0
        %350 = vmatpush1.msra.mxu0 %v322
        %351 = vmatprep.subr.mxu0 0.0
        %352 = vmatpush1.msra.mxu0 %v323
        %353 = vmatprep.subr.mxu0 0.0
        %354 = vmatpush1.msra.mxu0 %v324
        %355 = vmatprep.subr.mxu0 0.0
        %356 = vmatpush1.msra.mxu0 %v325
        %357 = vmatprep.subr.mxu0 0.0
        %358 = vmatpush1.msra.mxu0 %v326
        %359 = vmatprep.subr.mxu0 0.0
        %360 = vmatpush1.msra.mxu0 0.0
        %361 = vmatprep.subr.mxu0 0.0
        %362 = vmatpush1.msra.mxu0 0.0
        %363 = vmatprep.subr.mxu0 0.0
        %364 = vmatpush1.msra.mxu0 0.0
        %365 = vmatprep.subr.mxu0 0.0
        %366 = vmatpush1.msra.mxu0 0.0
        %367 = vmatprep.subr.mxu0 0.0
        %368 = vmatpush1.msra.mxu0 0.0
        %369 = vmatprep.subr.mxu0 0.0
        %370 = vmatpush1.msra.mxu0 0.0
        %371 = vmatprep.subr.mxu0 0.0
        %372 = vmatpush1.msra.mxu0 0.0
        %373 = vmatprep.subr.mxu0 0.0
        %374 = vmatpush1.msra.mxu0 0.0
        %375 = vmatprep.subr.mxu0 0.0
        %376 = vmatpush1.msra.mxu0 0.0
        %377 = vmatprep.subr.mxu0 0.0
        %378 = vmatpush1.msra.mxu0 0.0
        %379 = vmatprep.subr.mxu0 0.0
        %380 = vmatpush1.msra.mxu0 0.0
        %381 = vmatprep.subr.mxu0 0.0
        %382 = vmatpush1.msra.mxu0 0.0
        %383 = vmatprep.subr.mxu0 0.0
        %384 = vmatpush1.msra.mxu0 0.0
        %385 = vmatprep.subr.mxu0 0.0
        %386 = vmatpush1.msra.mxu0 0.0
        %387 = vmatprep.subr.mxu0 0.0
        %388 = vmatpush1.msra.mxu0 0.0
        %389 = vmatprep.subr.mxu0 0.0
        %390 = vmatpush1.msra.mxu0 0.0
        %391 = vmatprep.mubr.f32.mxu0 0.0
        %392 = vmatmul.mubr.f32.gmra.mrb[0].mxu0 %v310
        %v393 = vpop.f32.mrb[0].mxu0
        %v394 = vadd.f32 0.0, %v393
        %v395 = vpop.f32.mrb[0].mxu0
        %396 = vdwg.mxu0
        %v397 = vmax.f32 %v394, 0.0
        %v398 = vld [vmem:[#allocation4] sm:$0xff]
        %v399 = vld [vmem:[#allocation4 + $0x8] sm:$0xff]
        %v400 = vld [vmem:[#allocation4 + $0x10] sm:$0xff]
        %v401 = vld [vmem:[#allocation4 + $0x18] sm:$0xff]
        %v402 = vld [vmem:[#allocation4 + $0x20] sm:$0xff]
        %v403 = vld [vmem:[#allocation4 + $0x28] sm:$0xff]
        %v404 = vld [vmem:[#allocation4 + $0x30] sm:$0xff]
        %v405 = vld [vmem:[#allocation4 + $0x38] sm:$0xff]
        %v406 = vld [vmem:[#allocation4 + $0x40] sm:$0xff]
        %v407 = vld [vmem:[#allocation4 + $0x48] sm:$0xff]
        %v408 = vld [vmem:[#allocation4 + $0x50] sm:$0xff]
        %v409 = vld [vmem:[#allocation4 + $0x58] sm:$0xff]
        %v410 = vld [vmem:[#allocation4 + $0x60] sm:$0xff]
        %v411 = vld [vmem:[#allocation4 + $0x68] sm:$0xff]
        %v412 = vld [vmem:[#allocation4 + $0x70] sm:$0xff]
        %v413 = vld [vmem:[#allocation4 + $0x78] sm:$0xff]
        %414 = vmatprep.subr.mxu0 0.0
        %415 = vmatpush1.msra.mxu0 %v398
        %416 = vmatprep.subr.mxu0 0.0
        %417 = vmatpush1.msra.mxu0 %v399
        %418 = vmatprep.subr.mxu0 0.0
        %419 = vmatpush1.msra.mxu0 %v400
        %420 = vmatprep.subr.mxu0 0.0
        %421 = vmatpush1.msra.mxu0 %v401
        %422 = vmatprep.subr.mxu0 0.0
        %423 = vmatpush1.msra.mxu0 %v402
        %424 = vmatprep.subr.mxu0 0.0
        %425 = vmatpush1.msra.mxu0 %v403
        %426 = vmatprep.subr.mxu0 0.0
        %427 = vmatpush1.msra.mxu0 %v404
        %428 = vmatprep.subr.mxu0 0.0
        %429 = vmatpush1.msra.mxu0 %v405
        %430 = vmatprep.subr.mxu0 0.0
        %431 = vmatpush1.msra.mxu0 %v406
        %432 = vmatprep.subr.mxu0 0.0
        %433 = vmatpush1.msra.mxu0 %v407
        %434 = vmatprep.subr.mxu0 0.0
        %435 = vmatpush1.msra.mxu0 %v408
        %436 = vmatprep.subr.mxu0 0.0
        %437 = vmatpush1.msra.mxu0 %v409
        %438 = vmatprep.subr.mxu0 0.0
        %439 = vmatpush1.msra.mxu0 %v410
        %440 = vmatprep.subr.mxu0 0.0
        %441 = vmatpush1.msra.mxu0 %v411
        %442 = vmatprep.subr.mxu0 0.0
        %443 = vmatpush1.msra.mxu0 %v412
        %444 = vmatprep.subr.mxu0 0.0
        %445 = vmatpush1.msra.mxu0 %v413
        %446 = vmatprep.subr.mxu0 0.0
        %447 = vmatpush1.msra.mxu0 0.0
        %448 = vmatprep.subr.mxu0 0.0
        %449 = vmatpush1.msra.mxu0 0.0
        %450 = vmatprep.subr.mxu0 0.0
        %451 = vmatpush1.msra.mxu0 0.0
        %452 = vmatprep.subr.mxu0 0.0
        %453 = vmatpush1.msra.mxu0 0.0
        %454 = vmatprep.subr.mxu0 0.0
        %455 = vmatpush1.msra.mxu0 0.0
        %456 = vmatprep.subr.mxu0 0.0
        %457 = vmatpush1.msra.mxu0 0.0
        %458 = vmatprep.subr.mxu0 0.0
        %459 = vmatpush1.msra.mxu0 0.0
        %460 = vmatprep.subr.mxu0 0.0
        %461 = vmatpush1.msra.mxu0 0.0
        %462 = vmatprep.subr.mxu0 0.0
        %463 = vmatpush1.msra.mxu0 0.0
        %464 = vmatprep.subr.mxu0 0.0
        %465 = vmatpush1.msra.mxu0 0.0
        %466 = vmatprep.subr.mxu0 0.0
        %467 = vmatpush1.msra.mxu0 0.0
        %468 = vmatprep.subr.mxu0 0.0
        %469 = vmatpush1.msra.mxu0 0.0
        %470 = vmatprep.subr.mxu0 0.0
        %471 = vmatpush1.msra.mxu0 0.0
        %472 = vmatprep.subr.mxu0 0.0
        %473 = vmatpush1.msra.mxu0 0.0
        %474 = vmatprep.subr.mxu0 0.0
        %475 = vmatpush1.msra.mxu0 0.0
        %476 = vmatprep.subr.mxu0 0.0
        %477 = vmatpush1.msra.mxu0 0.0
        %478 = vmatprep.mubr.f32.mxu0 0.0
        %479 = vmatmul.mubr.f32.gmra.mrb[0].mxu0 %v397
        %v480 = vpop.f32.mrb[0].mxu0
        %v481 = vadd.f32 0.0, %v480
        %v482 = vpop.f32.mrb[0].mxu0
        %483 = vdwg.mxu0
        %v484 = vadd.f32 %v223, %v481
        %485 = vst [vmem:[%s222] sm:$0xff] %v484
        %p486 = scmp.lt.s32.totalorder %s17, 1
        %s487 = scalar_select %p486, %s17, 1
        %s488 = smul.addr %s487, 8
        %s489 = scalar_lea.vmem %s4, %s488
        // Predicated region
        $region45: #{residual_block.1} parent=35 // pred_check
          %p490 = pneg %p124
        $region46: #{residual_block.1} parent=35 // pred_check_branch
          %492 = sbr.rel (%p490) target = $region48
        $region47: #{residual_block.1} parent=35 // pred_region
          _
        $region48: #{residual_block.1} parent=35 // pred_fallthru
          _
      $region36: #{residual_block.1} parent=5 // pred_fallthru
        _
      %p493 = scmp.le.s32.totalorder 2, %s12
      // Predicated region
      $region49: #{residual_block.1} parent=5 // pred_check
        %p494 = pneg %p493
      $region50: #{residual_block.1} parent=5 // pred_check_branch
        %496 = sbr.rel (%p494) target = $region52
      $region51: #{residual_block.1} parent=5 // pred_region
        %s497 = ssub.s32 %s12, 2
        // Predicated region
        $region53: #{residual_block.1} parent=51 // pred_check
          %p498 = pneg %p130
        $region54: #{residual_block.1} parent=51 // pred_check_branch
          %500 = sbr.rel (%p498) target = $region56
        $region55: #{residual_block.1} parent=51 // pred_region
          %p501 = scmp.lt.s32.totalorder %s18, 1
          %s502 = scalar_select %p501, %s18, 1
          %s503 = smul.addr %s502, 8
          %s504 = scalar_lea.vmem %s4, %s503
        $region56: #{residual_block.1} parent=51 // pred_fallthru
          _
      $region52: #{residual_block.1} parent=5 // pred_fallthru
        _
    $region6: #{residual_block.1} parent=1 // loop_footer
      %s16 = sadd.s32 1, %s12
    $region7: #{residual_block.1} parent=1 // loop_footer_branch
      %11 = sbr.rel target = $region3
    $region8: #{residual_block.1} parent=1 // loop_exit
      _
    %505 = vsyncpa [#allocation3], 1
    %s506 = scalar_lea.sflag [#allocation3], 1
    %507 = vsyncpa %s506, 1
    %508 = vsyncpa [#allocation5], 1

</llo_original>
